<compile_context>
chip_gen: v7x
topology: tpu7x:2x2x1
jax: 0.10.0
libtpu: 0.0.40
codegen_flags: <defaults>
</compile_context>

<pallas_src>
import numpy as np
import jax
import jax.numpy as jnp
from jax.experimental import pallas as pl
from jax.experimental.pallas import tpu as pltpu


def make_bilinear_matrix(out_size: int, in_size: int) -> np.ndarray:
    """1-D interpolation matrix R (out_size, in_size) matching
    F.interpolate(mode='bilinear', align_corners=False, antialias=False)."""
    R = np.zeros((out_size, in_size), dtype=np.float32)
    scale = in_size / out_size
    for i in range(out_size):
        src = (i + 0.5) * scale - 0.5
        src = max(src, 0.0)
        x0 = int(np.floor(src))
        x0 = min(x0, in_size - 1)
        x1 = min(x0 + 1, in_size - 1)
        w1 = src - x0
        w0 = 1.0 - w1
        R[i, x0] += w0
        R[i, x1] += w1
    return R


def _build_fused_kernel(level_meta, coeffs, tb, tiles_per_core, Hg, Wg, n_mats):
    """Builds the fused multi-level kernel as a closure over static metadata.

    Ref layout (positional):
      gt, pred_0..pred_{L-1}, (rh_s, rwt_s) for each unique matrix slot,
      out, acc_0..acc_{L-1} (VMEM scratch).
    """
    L = len(level_meta)

    def kernel(*refs):
        idx = 0
        gt_ref = refs[idx]; idx += 1
        pred_refs = refs[idx:idx + L]; idx += L
        mat_refs = refs[idx:idx + 2 * n_mats]; idx += 2 * n_mats
        out_ref = refs[idx]; idx += 1
        acc_refs = refs[idx:idx + L]

        t = pl.program_id(1)  # "arbitrary" batch-tile axis

        @pl.when(t == 0)
        def _init():
            for acc in acc_refs:
                acc[...] = jnp.zeros_like(acc)

        gt = gt_ref[...].astype(jnp.float32)           # (TB, Hg, Wg)
        gt2d = None
        if any(m["mat_slot"] is not None for m in level_meta):
            gt2d = gt.reshape(tb * Hg, Wg)             # fold TB into matmul M

        resampled = {}                                 # slot -> resampled gt
        for li, m in enumerate(level_meta):
            Hp, Wp = m["Hp"], m["Wp"]
            pred = pred_refs[li][...].astype(jnp.float32)   # (TB, Hp, Wp)
            slot = m["mat_slot"]
            if slot is None:
                # scale == 1: bilinear resample is the identity; no matmuls.
                cur = gt
            elif slot in resampled:
                cur = resampled[slot]                  # shared across levels
            else:
                rh = mat_refs[2 * slot][...]           # (Hp, Hg) f32
                rwt = mat_refs[2 * slot + 1][...]      # (Wg, Wp) f32
                # width pass: one big (TB*Hg, Wg) @ (Wg, Wp) MXU matmul
                tmp = jnp.dot(gt2d, rwt, preferred_element_type=jnp.float32)
                tmp = tmp.reshape(tb, Hg, Wp)
                # height pass: batched (Hp, Hg) @ (Hg, Wp)
                rh_b = jnp.broadcast_to(rh, (tb, Hp, Hg))
                cur = jnp.einsum("bph,bhw->bpw", rh_b, tmp,
                                 preferred_element_type=jnp.float32)
                cur = cur * m["inv_scale"]             # disparity rescale 1/scale
                resampled[slot] = cur
            d = pred - cur
            ad = jnp.abs(d)
            # SmoothL1, beta = 1.0
            loss = jnp.where(ad < 1.0, 0.5 * d * d, ad - 0.5)
            acc_refs[li][...] += loss                  # elementwise VPU accumulate

        @pl.when(t == tiles_per_core - 1)
        def _finalize():
            total = jnp.float32(0.0)
            for li in range(L):
                total = total + jnp.float32(coeffs[li]) * jnp.sum(acc_refs[li][...])
            out_ref[...] = total.reshape(1, 1, 1)

    return kernel


def _choose_batch_tile(B, Hg, Wg, level_meta, mats_bytes, in_itemsize,
                       vmem_budget_bytes=16 * 1024 * 1024):
    """Largest batch tile whose estimated VMEM footprint fits a conservative
    budget (safe on v7x's 64 MiB VMEM / 32 MiB scoped default)."""
    per_b = 2 * Hg * Wg * in_itemsize            # gt tile, double-buffered
    per_b += 3 * Hg * Wg * 4                     # f32 upcast + width-pass temp
    for m in level_meta:
        hp, wp = m["Hp"], m["Wp"]
        per_b += 2 * hp * wp * in_itemsize       # pred tile, double-buffered
        per_b += 3 * hp * wp * 4                 # accumulator + cur/loss temps
    budget = max(vmem_budget_bytes - mats_bytes, per_b)

    tb = 1
    for d in range(1, B + 1):
        if B % d == 0 and d * per_b <= budget:
            tb = d
    # Prefer >= 2 batch tiles so the second TensorCore gets work.
    if B // tb == 1 and tb % 2 == 0 and B >= 2:
        tb //= 2
    return tb


def disparity_loss(predicted_disparity_pyramid, gt_disparity,
                   weights=(0.6, 0.8, 1.0, 1.0)):
    """Faithful port of Disparity_Loss.forward (smooth_l1, mean reduction)."""
    if isinstance(predicted_disparity_pyramid, (list, tuple)):
        preds = list(predicted_disparity_pyramid)
        lvl_weights = [float(weights[i]) for i in range(len(preds))]
    else:
        preds = [predicted_disparity_pyramid]
        lvl_weights = [1.0]

    N, C, Hg, Wg = gt_disparity.shape
    B = N * C
    gt_flat = gt_disparity.reshape(B, Hg, Wg)      # keep producer dtype (bf16 ok)

    level_meta = []
    mat_slot_of = {}                               # (Hp, Wp) -> slot index
    mats = []                                      # [(rh (Hp,Hg), rw^T (Wg,Wp))]
    for pred in preds:
        _, _, Hp, Wp = pred.shape
        scale = Wg // Wp
        assert scale >= 1 and Wg // scale == Wp
        if Hp == Hg and Wp == Wg:                  # scale==1 -> identity resample
            slot = None
        else:
            key = (Hp, Wp)
            if key not in mat_slot_of:
                mat_slot_of[key] = len(mats)
                rh = jnp.asarray(make_bilinear_matrix(Hp, Hg))        # (Hp, Hg)
                rw = jnp.asarray(make_bilinear_matrix(Wp, Wg))        # (Wp, Wg)
                mats.append((rh, rw.T))                               # rw^T: (Wg, Wp)
            slot = mat_slot_of[key]
        level_meta.append(dict(Hp=Hp, Wp=Wp, mat_slot=slot,
                               inv_scale=1.0 / float(scale)))

    mats_bytes = sum(2 * (rh.shape[0] * rh.shape[1] + rwt.shape[0] * rwt.shape[1]) * 4
                     for rh, rwt in mats)
    in_itemsize = jnp.dtype(gt_flat.dtype).itemsize
    tb = _choose_batch_tile(B, Hg, Wg, level_meta, mats_bytes, in_itemsize)
    num_tiles = B // tb
    ncores = 2 if (num_tiles % 2 == 0 and num_tiles >= 2) else 1
    tiles_per_core = num_tiles // ncores

    # weight_i * mean over (B, Hp, Wp) folded into a single coefficient
    coeffs = [lvl_weights[i] / float(B * m["Hp"] * m["Wp"])
              for i, m in enumerate(level_meta)]

    batch_map = lambda p, t: (p * tiles_per_core + t, 0, 0)
    const_map = lambda p, t: (0, 0)

    inputs = [gt_flat]
    in_specs = [pl.BlockSpec((tb, Hg, Wg), batch_map)]
    for i, pred in enumerate(preds):
        m = level_meta[i]
        inputs.append(pred.reshape(B, m["Hp"], m["Wp"]))
        in_specs.append(pl.BlockSpec((tb, m["Hp"], m["Wp"]), batch_map))
    for rh, rwt in mats:
        inputs.append(rh)
        inputs.append(rwt)
        in_specs.append(pl.BlockSpec(tuple(rh.shape), const_map))
        in_specs.append(pl.BlockSpec(tuple(rwt.shape), const_map))

    scratch_shapes = [pltpu.VMEM((tb, m["Hp"], m["Wp"]), jnp.float32)
                      for m in level_meta]

    kernel = _build_fused_kernel(level_meta, coeffs, tb, tiles_per_core,
                                 Hg, Wg, len(mats))

    out = pl.pallas_call(
        kernel,
        out_shape=jax.ShapeDtypeStruct((ncores, 1, 1), jnp.float32),
        grid=(ncores, tiles_per_core),
        in_specs=in_specs,
        out_specs=pl.BlockSpec((1, 1, 1), lambda p, t: (p, 0, 0)),
        scratch_shapes=scratch_shapes,
        compiler_params=pltpu.CompilerParams(
            dimension_semantics=("parallel", "arbitrary"),
            vmem_limit_bytes=32 * 1024 * 1024),
    )(*inputs)
    return jnp.sum(out)   # sum the per-core partials


# ------------------------- pure-JAX reference ------------------------------
def _reference(pyramid, gt, weights):
    N, C, Hg, Wg = gt.shape
    gt_flat = gt.reshape(N * C, Hg, Wg).astype(jnp.float32)
    total = 0.0
    for idx, pred in enumerate(pyramid):
        _, _, Hp, Wp = pred.shape
        scale = Wg // Wp
        rh = jnp.asarray(make_bilinear_matrix(Hp, Hg))
        rw = jnp.asarray(make_bilinear_matrix(Wp, Wg))
        cur_gt = jnp.einsum('ph,bhw,qw->bpq', rh, gt_flat, rw) * (1.0 / scale)
        d = pred.reshape(N * C, Hp, Wp).astype(jnp.float32) - cur_gt
        ad = jnp.abs(d)
        loss = jnp.where(ad < 1.0, 0.5 * d * d, ad - 0.5)
        total = total + weights[idx] * jnp.mean(loss)
    return total


if __name__ == "__main__":
    key = jax.random.PRNGKey(0)
    k_gt, k0, k1, k2, k3 = jax.random.split(key, 5)

    N, C, H, W = 2, 1, 16, 16
    gt = jax.random.uniform(k_gt, (N, C, H, W), jnp.float32) * 8.0

    # pyramid: coarse -> fine, widths 4, 8, 16, 16 (scales 4, 2, 1, 1)
    pyramid = [
        jax.random.uniform(k0, (N, C, 4, 4), jnp.float32) * 2.0,
        jax.random.uniform(k1, (N, C, 8, 8), jnp.float32) * 4.0,
        jax.random.uniform(k2, (N, C, 16, 16), jnp.float32) * 8.0,
        jax.random.uniform(k3, (N, C, 16, 16), jnp.float32) * 8.0,
    ]
    weights = (0.6, 0.8, 1.0, 1.0)

    out = disparity_loss(pyramid, gt, weights)
    out = jax.block_until_ready(out)

    ref = jax.block_until_ready(_reference(pyramid, gt, weights))
    np.testing.assert_allclose(np.asarray(out), np.asarray(ref),
                               rtol=1e-5, atol=1e-5)
    print("KERNEL_OK")
</pallas_src>

<mosaic_0001>
module attributes {stable_mosaic.version = 11 : i64} {
  func.func @kernel(%arg0: i32, %arg1: i32, %arg2: memref<1x16x16xf32, #tpu.memory_space<vmem>>, %arg3: memref<1x4x4xf32, #tpu.memory_space<vmem>>, %arg4: memref<1x8x8xf32, #tpu.memory_space<vmem>>, %arg5: memref<1x16x16xf32, #tpu.memory_space<vmem>>, %arg6: memref<1x16x16xf32, #tpu.memory_space<vmem>>, %arg7: memref<4x16xf32, #tpu.memory_space<vmem>>, %arg8: memref<16x4xf32, #tpu.memory_space<vmem>>, %arg9: memref<8x16xf32, #tpu.memory_space<vmem>>, %arg10: memref<16x8xf32, #tpu.memory_space<vmem>>, %arg11: memref<1x1x1xf32, #tpu.memory_space<vmem>>, %arg12: memref<1x4x4xf32, #tpu.memory_space<vmem>>, %arg13: memref<1x8x8xf32, #tpu.memory_space<vmem>>, %arg14: memref<1x16x16xf32, #tpu.memory_space<vmem>>, %arg15: memref<1x16x16xf32, #tpu.memory_space<vmem>>) attributes {dimension_semantics = [#tpu.dimension_semantics<parallel>, #tpu.dimension_semantics<arbitrary>], iteration_bounds = array<i64: 2, 1>, scalar_prefetch = 0 : i64, scratch_operands = 4 : i64, tpu.core_type = #tpu.core_type<tc>, window_params = [{transform_indices = @transform_0, window_bounds = array<i64: 1, 16, 16>}, {transform_indices = @transform_1, window_bounds = array<i64: 1, 4, 4>}, {transform_indices = @transform_2, window_bounds = array<i64: 1, 8, 8>}, {transform_indices = @transform_3, window_bounds = array<i64: 1, 16, 16>}, {transform_indices = @transform_4, window_bounds = array<i64: 1, 16, 16>}, {pipeline_mode = #tpu.pipeline_mode<synchronous>, transform_indices = @transform_5, window_bounds = array<i64: 4, 16>}, {pipeline_mode = #tpu.pipeline_mode<synchronous>, transform_indices = @transform_6, window_bounds = array<i64: 16, 4>}, {pipeline_mode = #tpu.pipeline_mode<synchronous>, transform_indices = @transform_7, window_bounds = array<i64: 8, 16>}, {pipeline_mode = #tpu.pipeline_mode<synchronous>, transform_indices = @transform_8, window_bounds = array<i64: 16, 8>}, {transform_indices = @transform_9, window_bounds = array<i64: 1, 1, 1>}]} {
    %c0_i32 = arith.constant 0 : i32
    %0 = arith.cmpi eq, %arg1, %c0_i32 : i32
    %1 = arith.extui %0 : i1 to i32
    %c0_i32_0 = arith.constant 0 : i32
    %2 = arith.cmpi ne, %1, %c0_i32_0 : i32
    scf.if %2 {
      %cst_66 = arith.constant 0.000000e+00 : f32
      %80 = vector.broadcast %cst_66 : f32 to vector<1x4x4xf32>
      %c0_67 = arith.constant 0 : index
      %c0_68 = arith.constant 0 : index
      %c0_69 = arith.constant 0 : index
      %81 = vector.load %arg12[%c0_67, %c0_68, %c0_69] : memref<1x4x4xf32, #tpu.memory_space<vmem>>, vector<1x4x4xf32>
      tpu.vector_store %arg12[%c0_67, %c0_68, %c0_69], %80 {strides = array<i32>} : memref<1x4x4xf32, #tpu.memory_space<vmem>>, vector<1x4x4xf32>,
      %cst_70 = arith.constant 0.000000e+00 : f32
      %82 = vector.broadcast %cst_70 : f32 to vector<1x8x8xf32>
      %c0_71 = arith.constant 0 : index
      %c0_72 = arith.constant 0 : index
      %c0_73 = arith.constant 0 : index
      %83 = vector.load %arg13[%c0_71, %c0_72, %c0_73] : memref<1x8x8xf32, #tpu.memory_space<vmem>>, vector<1x8x8xf32>
      tpu.vector_store %arg13[%c0_71, %c0_72, %c0_73], %82 {strides = array<i32>} : memref<1x8x8xf32, #tpu.memory_space<vmem>>, vector<1x8x8xf32>,
      %cst_74 = arith.constant 0.000000e+00 : f32
      %84 = vector.broadcast %cst_74 : f32 to vector<1x16x16xf32>
      %c0_75 = arith.constant 0 : index
      %c0_76 = arith.constant 0 : index
      %c0_77 = arith.constant 0 : index
      %85 = vector.load %arg14[%c0_75, %c0_76, %c0_77] : memref<1x16x16xf32, #tpu.memory_space<vmem>>, vector<1x16x16xf32>
      tpu.vector_store %arg14[%c0_75, %c0_76, %c0_77], %84 {strides = array<i32>} : memref<1x16x16xf32, #tpu.memory_space<vmem>>, vector<1x16x16xf32>,
      %cst_78 = arith.constant 0.000000e+00 : f32
      %86 = vector.broadcast %cst_78 : f32 to vector<1x16x16xf32>
      %c0_79 = arith.constant 0 : index
      %c0_80 = arith.constant 0 : index
      %c0_81 = arith.constant 0 : index
      %87 = vector.load %arg15[%c0_79, %c0_80, %c0_81] : memref<1x16x16xf32, #tpu.memory_space<vmem>>, vector<1x16x16xf32>
      tpu.vector_store %arg15[%c0_79, %c0_80, %c0_81], %86 {strides = array<i32>} : memref<1x16x16xf32, #tpu.memory_space<vmem>>, vector<1x16x16xf32>,
    } else {
    }
    %c0 = arith.constant 0 : index
    %c0_1 = arith.constant 0 : index
    %c0_2 = arith.constant 0 : index
    %3 = vector.load %arg2[%c0, %c0_1, %c0_2] : memref<1x16x16xf32, #tpu.memory_space<vmem>>, vector<1x16x16xf32>
    %4 = vector.shape_cast %3 : vector<1x16x16xf32> to vector<16x16xf32>
    %c0_3 = arith.constant 0 : index
    %c0_4 = arith.constant 0 : index
    %c0_5 = arith.constant 0 : index
    %5 = vector.load %arg3[%c0_3, %c0_4, %c0_5] : memref<1x4x4xf32, #tpu.memory_space<vmem>>, vector<1x4x4xf32>
    %c0_6 = arith.constant 0 : index
    %c0_7 = arith.constant 0 : index
    %6 = vector.load %arg7[%c0_6, %c0_7] : memref<4x16xf32, #tpu.memory_space<vmem>>, vector<4x16xf32>
    %c0_8 = arith.constant 0 : index
    %c0_9 = arith.constant 0 : index
    %7 = vector.load %arg8[%c0_8, %c0_9] : memref<16x4xf32, #tpu.memory_space<vmem>>, vector<16x4xf32>
    %cst = arith.constant dense<0.000000e+00> : vector<16x4xf32>
    %8 = tpu.matmul %4, %7, %cst {dimension_numbers = #tpu.dot_dimension_numbers<[1], [0], [0], [1], [0, 0, 1, 1], [], []>} : vector<16x16xf32>, vector<16x4xf32>, vector<16x4xf32> -> vector<16x4xf32>
    %9 = vector.shape_cast %8 : vector<16x4xf32> to vector<1x16x4xf32>
    %10 = vector.shape_cast %6 : vector<4x16xf32> to vector<1x4x16xf32>
    "tpu.trace_start"() <{level = 10 : i32, message = "bph,bhw->bpw"}> : () -> ()
    %cst_10 = arith.constant dense<0.000000e+00> : vector<1x4x4xf32>
    %11 = tpu.matmul %10, %9, %cst_10 {dimension_numbers = #tpu.dot_dimension_numbers<[2], [1], [1], [2], [0, 0, 0, 1, 1, 2], [0], [0]>} : vector<1x4x16xf32>, vector<1x16x4xf32>, vector<1x4x4xf32> -> vector<1x4x4xf32>
    "tpu.trace_stop"() : () -> ()
    %cst_11 = arith.constant 2.500000e-01 : f32
    %12 = vector.broadcast %cst_11 : f32 to vector<1x4x4xf32>
    %13 = arith.mulf %11, %12 : vector<1x4x4xf32>
    %14 = arith.subf %5, %13 : vector<1x4x4xf32>
    %15 = math.absf %14 : vector<1x4x4xf32>
    %cst_12 = arith.constant 1.000000e+00 : f32
    %16 = vector.broadcast %cst_12 : f32 to vector<1x4x4xf32>
    %17 = arith.cmpf olt, %15, %16 : vector<1x4x4xf32>
    %cst_13 = arith.constant 5.000000e-01 : f32
    %18 = vector.broadcast %cst_13 : f32 to vector<1x4x4xf32>
    %19 = arith.mulf %18, %14 : vector<1x4x4xf32>
    %20 = arith.mulf %19, %14 : vector<1x4x4xf32>
    %cst_14 = arith.constant 5.000000e-01 : f32
    %21 = vector.broadcast %cst_14 : f32 to vector<1x4x4xf32>
    %22 = arith.subf %15, %21 : vector<1x4x4xf32>
    %23 = arith.select %17, %20, %22 : vector<1x4x4xi1>, vector<1x4x4xf32>
    %c0_15 = arith.constant 0 : index
    %c0_16 = arith.constant 0 : index
    %c0_17 = arith.constant 0 : index
    %24 = vector.load %arg12[%c0_15, %c0_16, %c0_17] : memref<1x4x4xf32, #tpu.memory_space<vmem>>, vector<1x4x4xf32>
    %25 = arith.addf %24, %23 : vector<1x4x4xf32>
    %c0_18 = arith.constant 0 : index
    %c0_19 = arith.constant 0 : index
    %c0_20 = arith.constant 0 : index
    %26 = vector.load %arg12[%c0_18, %c0_19, %c0_20] : memref<1x4x4xf32, #tpu.memory_space<vmem>>, vector<1x4x4xf32>
    tpu.vector_store %arg12[%c0_18, %c0_19, %c0_20], %25 {strides = array<i32>} : memref<1x4x4xf32, #tpu.memory_space<vmem>>, vector<1x4x4xf32>,
    %c0_21 = arith.constant 0 : index
    %c0_22 = arith.constant 0 : index
    %c0_23 = arith.constant 0 : index
    %27 = vector.load %arg4[%c0_21, %c0_22, %c0_23] : memref<1x8x8xf32, #tpu.memory_space<vmem>>, vector<1x8x8xf32>
    %c0_24 = arith.constant 0 : index
    %c0_25 = arith.constant 0 : index
    %28 = vector.load %arg9[%c0_24, %c0_25] : memref<8x16xf32, #tpu.memory_space<vmem>>, vector<8x16xf32>
    %c0_26 = arith.constant 0 : index
    %c0_27 = arith.constant 0 : index
    %29 = vector.load %arg10[%c0_26, %c0_27] : memref<16x8xf32, #tpu.memory_space<vmem>>, vector<16x8xf32>
    %cst_28 = arith.constant dense<0.000000e+00> : vector<16x8xf32>
    %30 = tpu.matmul %4, %29, %cst_28 {dimension_numbers = #tpu.dot_dimension_numbers<[1], [0], [0], [1], [0, 0, 1, 1], [], []>} : vector<16x16xf32>, vector<16x8xf32>, vector<16x8xf32> -> vector<16x8xf32>
    %31 = vector.shape_cast %30 : vector<16x8xf32> to vector<1x16x8xf32>
    %32 = vector.shape_cast %28 : vector<8x16xf32> to vector<1x8x16xf32>
    "tpu.trace_start"() <{level = 10 : i32, message = "bph,bhw->bpw"}> : () -> ()
    %cst_29 = arith.constant dense<0.000000e+00> : vector<1x8x8xf32>
    %33 = tpu.matmul %32, %31, %cst_29 {dimension_numbers = #tpu.dot_dimension_numbers<[2], [1], [1], [2], [0, 0, 0, 1, 1, 2], [0], [0]>} : vector<1x8x16xf32>, vector<1x16x8xf32>, vector<1x8x8xf32> -> vector<1x8x8xf32>
    "tpu.trace_stop"() : () -> ()
    %cst_30 = arith.constant 5.000000e-01 : f32
    %34 = vector.broadcast %cst_30 : f32 to vector<1x8x8xf32>
    %35 = arith.mulf %33, %34 : vector<1x8x8xf32>
    %36 = arith.subf %27, %35 : vector<1x8x8xf32>
    %37 = math.absf %36 : vector<1x8x8xf32>
    %cst_31 = arith.constant 1.000000e+00 : f32
    %38 = vector.broadcast %cst_31 : f32 to vector<1x8x8xf32>
    %39 = arith.cmpf olt, %37, %38 : vector<1x8x8xf32>
    %cst_32 = arith.constant 5.000000e-01 : f32
    %40 = vector.broadcast %cst_32 : f32 to vector<1x8x8xf32>
    %41 = arith.mulf %40, %36 : vector<1x8x8xf32>
    %42 = arith.mulf %41, %36 : vector<1x8x8xf32>
    %cst_33 = arith.constant 5.000000e-01 : f32
    %43 = vector.broadcast %cst_33 : f32 to vector<1x8x8xf32>
    %44 = arith.subf %37, %43 : vector<1x8x8xf32>
    %45 = arith.select %39, %42, %44 : vector<1x8x8xi1>, vector<1x8x8xf32>
    %c0_34 = arith.constant 0 : index
    %c0_35 = arith.constant 0 : index
    %c0_36 = arith.constant 0 : index
    %46 = vector.load %arg13[%c0_34, %c0_35, %c0_36] : memref<1x8x8xf32, #tpu.memory_space<vmem>>, vector<1x8x8xf32>
    %47 = arith.addf %46, %45 : vector<1x8x8xf32>
    %c0_37 = arith.constant 0 : index
    %c0_38 = arith.constant 0 : index
    %c0_39 = arith.constant 0 : index
    %48 = vector.load %arg13[%c0_37, %c0_38, %c0_39] : memref<1x8x8xf32, #tpu.memory_space<vmem>>, vector<1x8x8xf32>
    tpu.vector_store %arg13[%c0_37, %c0_38, %c0_39], %47 {strides = array<i32>} : memref<1x8x8xf32, #tpu.memory_space<vmem>>, vector<1x8x8xf32>,
    %c0_40 = arith.constant 0 : index
    %c0_41 = arith.constant 0 : index
    %c0_42 = arith.constant 0 : index
    %49 = vector.load %arg5[%c0_40, %c0_41, %c0_42] : memref<1x16x16xf32, #tpu.memory_space<vmem>>, vector<1x16x16xf32>
    %50 = arith.subf %49, %3 : vector<1x16x16xf32>
    %51 = math.absf %50 : vector<1x16x16xf32>
    %cst_43 = arith.constant 1.000000e+00 : f32
    %52 = vector.broadcast %cst_43 : f32 to vector<1x16x16xf32>
    %53 = arith.cmpf olt, %51, %52 : vector<1x16x16xf32>
    %cst_44 = arith.constant 5.000000e-01 : f32
    %54 = vector.broadcast %cst_44 : f32 to vector<1x16x16xf32>
    %55 = arith.mulf %54, %50 : vector<1x16x16xf32>
    %56 = arith.mulf %55, %50 : vector<1x16x16xf32>
    %cst_45 = arith.constant 5.000000e-01 : f32
    %57 = vector.broadcast %cst_45 : f32 to vector<1x16x16xf32>
    %58 = arith.subf %51, %57 : vector<1x16x16xf32>
    %59 = arith.select %53, %56, %58 : vector<1x16x16xi1>, vector<1x16x16xf32>
    %c0_46 = arith.constant 0 : index
    %c0_47 = arith.constant 0 : index
    %c0_48 = arith.constant 0 : index
    %60 = vector.load %arg14[%c0_46, %c0_47, %c0_48] : memref<1x16x16xf32, #tpu.memory_space<vmem>>, vector<1x16x16xf32>
    %61 = arith.addf %60, %59 : vector<1x16x16xf32>
    %c0_49 = arith.constant 0 : index
    %c0_50 = arith.constant 0 : index
    %c0_51 = arith.constant 0 : index
    %62 = vector.load %arg14[%c0_49, %c0_50, %c0_51] : memref<1x16x16xf32, #tpu.memory_space<vmem>>, vector<1x16x16xf32>
    tpu.vector_store %arg14[%c0_49, %c0_50, %c0_51], %61 {strides = array<i32>} : memref<1x16x16xf32, #tpu.memory_space<vmem>>, vector<1x16x16xf32>,
    %c0_52 = arith.constant 0 : index
    %c0_53 = arith.constant 0 : index
    %c0_54 = arith.constant 0 : index
    %63 = vector.load %arg6[%c0_52, %c0_53, %c0_54] : memref<1x16x16xf32, #tpu.memory_space<vmem>>, vector<1x16x16xf32>
    %64 = arith.subf %63, %3 : vector<1x16x16xf32>
    %65 = math.absf %64 : vector<1x16x16xf32>
    %cst_55 = arith.constant 1.000000e+00 : f32
    %66 = vector.broadcast %cst_55 : f32 to vector<1x16x16xf32>
    %67 = arith.cmpf olt, %65, %66 : vector<1x16x16xf32>
    %cst_56 = arith.constant 5.000000e-01 : f32
    %68 = vector.broadcast %cst_56 : f32 to vector<1x16x16xf32>
    %69 = arith.mulf %68, %64 : vector<1x16x16xf32>
    %70 = arith.mulf %69, %64 : vector<1x16x16xf32>
    %cst_57 = arith.constant 5.000000e-01 : f32
    %71 = vector.broadcast %cst_57 : f32 to vector<1x16x16xf32>
    %72 = arith.subf %65, %71 : vector<1x16x16xf32>
    %73 = arith.select %67, %70, %72 : vector<1x16x16xi1>, vector<1x16x16xf32>
    %c0_58 = arith.constant 0 : index
    %c0_59 = arith.constant 0 : index
    %c0_60 = arith.constant 0 : index
    %74 = vector.load %arg15[%c0_58, %c0_59, %c0_60] : memref<1x16x16xf32, #tpu.memory_space<vmem>>, vector<1x16x16xf32>
    %75 = arith.addf %74, %73 : vector<1x16x16xf32>
    %c0_61 = arith.constant 0 : index
    %c0_62 = arith.constant 0 : index
    %c0_63 = arith.constant 0 : index
    %76 = vector.load %arg15[%c0_61, %c0_62, %c0_63] : memref<1x16x16xf32, #tpu.memory_space<vmem>>, vector<1x16x16xf32>
    tpu.vector_store %arg15[%c0_61, %c0_62, %c0_63], %75 {strides = array<i32>} : memref<1x16x16xf32, #tpu.memory_space<vmem>>, vector<1x16x16xf32>,
    %c0_i32_64 = arith.constant 0 : i32
    %77 = arith.cmpi eq, %arg1, %c0_i32_64 : i32
    %78 = arith.extui %77 : i1 to i32
    %c0_i32_65 = arith.constant 0 : i32
    %79 = arith.cmpi ne, %78, %c0_i32_65 : i32
    scf.if %79 {
      %c0_66 = arith.constant 0 : index
      %c0_67 = arith.constant 0 : index
      %c0_68 = arith.constant 0 : index
      %80 = vector.load %arg12[%c0_66, %c0_67, %c0_68] : memref<1x4x4xf32, #tpu.memory_space<vmem>>, vector<1x4x4xf32>
      %81 = vector.shape_cast %80 : vector<1x4x4xf32> to vector<1x1x4x4xf32>
      %cst_69 = arith.constant dense<0.000000e+00> : vector<1xf32>
      %82 = vector.multi_reduction <add>, %81, %cst_69 [1, 2, 3] : vector<1x1x4x4xf32> to vector<1xf32>
      %83 = vector.shape_cast %82 : vector<1xf32> to vector<1x1x1x1xf32>
      %84 = vector.extract %83[0, 0, 0, 0] : f32 from vector<1x1x1x1xf32>
      %cst_70 = arith.constant 1.875000e-02 : f32
      %85 = arith.mulf %cst_70, %84 : f32
      %cst_71 = arith.constant 0.000000e+00 : f32
      %86 = arith.addf %cst_71, %85 : f32
      %c0_72 = arith.constant 0 : index
      %c0_73 = arith.constant 0 : index
      %c0_74 = arith.constant 0 : index
      %87 = vector.load %arg13[%c0_72, %c0_73, %c0_74] : memref<1x8x8xf32, #tpu.memory_space<vmem>>, vector<1x8x8xf32>
      %88 = vector.shape_cast %87 : vector<1x8x8xf32> to vector<1x1x8x8xf32>
      %cst_75 = arith.constant dense<0.000000e+00> : vector<1xf32>
      %89 = vector.multi_reduction <add>, %88, %cst_75 [1, 2, 3] : vector<1x1x8x8xf32> to vector<1xf32>
      %90 = vector.shape_cast %89 : vector<1xf32> to vector<1x1x1x1xf32>
      %91 = vector.extract %90[0, 0, 0, 0] : f32 from vector<1x1x1x1xf32>
      %cst_76 = arith.constant 6.250000e-03 : f32
      %92 = arith.mulf %cst_76, %91 : f32
      %93 = arith.addf %86, %92 : f32
      %c0_77 = arith.constant 0 : index
      %c0_78 = arith.constant 0 : index
      %c0_79 = arith.constant 0 : index
      %94 = vector.load %arg14[%c0_77, %c0_78, %c0_79] : memref<1x16x16xf32, #tpu.memory_space<vmem>>, vector<1x16x16xf32>
      %95 = vector.shape_cast %94 : vector<1x16x16xf32> to vector<1x1x16x16xf32>
      %cst_80 = arith.constant dense<0.000000e+00> : vector<1xf32>
      %96 = vector.multi_reduction <add>, %95, %cst_80 [1, 2, 3] : vector<1x1x16x16xf32> to vector<1xf32>
      %97 = vector.shape_cast %96 : vector<1xf32> to vector<1x1x1x1xf32>
      %98 = vector.extract %97[0, 0, 0, 0] : f32 from vector<1x1x1x1xf32>
      %cst_81 = arith.constant 0.001953125 : f32
      %99 = arith.mulf %cst_81, %98 : f32
      %100 = arith.addf %93, %99 : f32
      %c0_82 = arith.constant 0 : index
      %c0_83 = arith.constant 0 : index
      %c0_84 = arith.constant 0 : index
      %101 = vector.load %arg15[%c0_82, %c0_83, %c0_84] : memref<1x16x16xf32, #tpu.memory_space<vmem>>, vector<1x16x16xf32>
      %102 = vector.shape_cast %101 : vector<1x16x16xf32> to vector<1x1x16x16xf32>
      %cst_85 = arith.constant dense<0.000000e+00> : vector<1xf32>
      %103 = vector.multi_reduction <add>, %102, %cst_85 [1, 2, 3] : vector<1x1x16x16xf32> to vector<1xf32>
      %104 = vector.shape_cast %103 : vector<1xf32> to vector<1x1x1x1xf32>
      %105 = vector.extract %104[0, 0, 0, 0] : f32 from vector<1x1x1x1xf32>
      %cst_86 = arith.constant 0.001953125 : f32
      %106 = arith.mulf %cst_86, %105 : f32
      %107 = arith.addf %100, %106 : f32
      %108 = vector.broadcast %107 : f32 to vector<1x1x1xf32>
      %c0_87 = arith.constant 0 : index
      %c0_88 = arith.constant 0 : index
      %c0_89 = arith.constant 0 : index
      %109 = vector.load %arg11[%c0_87, %c0_88, %c0_89] : memref<1x1x1xf32, #tpu.memory_space<vmem>>, vector<1x1x1xf32>
      tpu.vector_store %arg11[%c0_87, %c0_88, %c0_89], %108 {strides = array<i32>} : memref<1x1x1xf32, #tpu.memory_space<vmem>>, vector<1x1x1xf32>,
    } else {
    }
    return
  }
  func.func @transform_0(%arg0: i32, %arg1: i32) -> (i32, i32, i32) {
    %c1_i32 = arith.constant 1 : i32
    %0 = arith.muli %arg0, %c1_i32 : i32
    %1 = arith.addi %0, %arg1 : i32
    %c0_i32 = arith.constant 0 : i32
    %c0_i32_0 = arith.constant 0 : i32
    %c0_i32_1 = arith.constant 0 : i32
    return %1, %c0_i32, %c0_i32_0 : i32, i32, i32
  }
  func.func @transform_1(%arg0: i32, %arg1: i32) -> (i32, i32, i32) {
    %c1_i32 = arith.constant 1 : i32
    %0 = arith.muli %arg0, %c1_i32 : i32
    %1 = arith.addi %0, %arg1 : i32
    %c0_i32 = arith.constant 0 : i32
    %c0_i32_0 = arith.constant 0 : i32
    %c0_i32_1 = arith.constant 0 : i32
    return %1, %c0_i32, %c0_i32_0 : i32, i32, i32
  }
  func.func @transform_2(%arg0: i32, %arg1: i32) -> (i32, i32, i32) {
    %c1_i32 = arith.constant 1 : i32
    %0 = arith.muli %arg0, %c1_i32 : i32
    %1 = arith.addi %0, %arg1 : i32
    %c0_i32 = arith.constant 0 : i32
    %c0_i32_0 = arith.constant 0 : i32
    %c0_i32_1 = arith.constant 0 : i32
    return %1, %c0_i32, %c0_i32_0 : i32, i32, i32
  }
  func.func @transform_3(%arg0: i32, %arg1: i32) -> (i32, i32, i32) {
    %c1_i32 = arith.constant 1 : i32
    %0 = arith.muli %arg0, %c1_i32 : i32
    %1 = arith.addi %0, %arg1 : i32
    %c0_i32 = arith.constant 0 : i32
    %c0_i32_0 = arith.constant 0 : i32
    %c0_i32_1 = arith.constant 0 : i32
    return %1, %c0_i32, %c0_i32_0 : i32, i32, i32
  }
  func.func @transform_4(%arg0: i32, %arg1: i32) -> (i32, i32, i32) {
    %c1_i32 = arith.constant 1 : i32
    %0 = arith.muli %arg0, %c1_i32 : i32
    %1 = arith.addi %0, %arg1 : i32
    %c0_i32 = arith.constant 0 : i32
    %c0_i32_0 = arith.constant 0 : i32
    %c0_i32_1 = arith.constant 0 : i32
    return %1, %c0_i32, %c0_i32_0 : i32, i32, i32
  }
  func.func @transform_5(%arg0: i32, %arg1: i32) -> (i32, i32) {
    %c0_i32 = arith.constant 0 : i32
    %c0_i32_0 = arith.constant 0 : i32
    %c0_i32_1 = arith.constant 0 : i32
    return %c0_i32, %c0_i32_0 : i32, i32
  }
  func.func @transform_6(%arg0: i32, %arg1: i32) -> (i32, i32) {
    %c0_i32 = arith.constant 0 : i32
    %c0_i32_0 = arith.constant 0 : i32
    %c0_i32_1 = arith.constant 0 : i32
    return %c0_i32, %c0_i32_0 : i32, i32
  }
  func.func @transform_7(%arg0: i32, %arg1: i32) -> (i32, i32) {
    %c0_i32 = arith.constant 0 : i32
    %c0_i32_0 = arith.constant 0 : i32
    %c0_i32_1 = arith.constant 0 : i32
    return %c0_i32, %c0_i32_0 : i32, i32
  }
  func.func @transform_8(%arg0: i32, %arg1: i32) -> (i32, i32) {
    %c0_i32 = arith.constant 0 : i32
    %c0_i32_0 = arith.constant 0 : i32
    %c0_i32_1 = arith.constant 0 : i32
    return %c0_i32, %c0_i32_0 : i32, i32
  }
  func.func @transform_9(%arg0: i32, %arg1: i32) -> (i32, i32, i32) {
    %c0_i32 = arith.constant 0 : i32
    %c0_i32_0 = arith.constant 0 : i32
    %c0_i32_1 = arith.constant 0 : i32
    return %arg0, %c0_i32, %c0_i32_0 : i32, i32, i32
  }
}

</mosaic_0001>

<llo_original>
// kernel: tpu_custom_call.1
$region0: #{tpu_custom_call.1}
  #allocation0 [shape = 'u32[]', space=smem, size = 0x4, offset = 0x4, fixed_abs, tag = 'smem constant byte address 0x4 - core index']
  #allocation1 [shape = 'u32[144,128]{1,0:T(1,128)}', space=vmem, size = 0x12000, scoped, tag = 'internal scratch']
  #allocation2 [shape = 'f32[1,4,4]{2,1,0:T(4,128)}', space=vmem, size = 0x800, scoped, tag = 'scratch operand']
  #allocation3 [shape = 'f32[1,8,8]{2,1,0:T(8,128)}', space=vmem, size = 0x1000, scoped, tag = 'scratch operand']
  #allocation4 [shape = 'f32[1,16,16]{2,1,0:T(8,128)}', space=vmem, size = 0x2000, scoped, tag = 'scratch operand']
  #allocation5 [shape = 'f32[1,16,16]{2,1,0:T(8,128)}', space=vmem, size = 0x2000, scoped, tag = 'scratch operand']
  %s0 = inlined_call_operand.vmem [shape: f32[2,16,16], index: 0, kind: input, shape index: {}]
  %s1 = inlined_call_operand.hbm [shape: f32[2,4,4], index: 1, kind: input, shape index: {}]
  %s2 = inlined_call_operand.vmem [shape: f32[2,8,8], index: 2, kind: input, shape index: {}]
  %s3 = inlined_call_operand.hbm [shape: f32[2,16,16], index: 3, kind: input, shape index: {}]
  %s4 = inlined_call_operand.hbm [shape: f32[2,16,16], index: 4, kind: input, shape index: {}]
  %s5 = inlined_call_operand.hbm [shape: f32[4,16], index: 5, kind: input, shape index: {}]
  %s6 = inlined_call_operand.vmem [shape: f32[16,4], index: 6, kind: input, shape index: {}]
  %s7 = inlined_call_operand.vmem [shape: f32[8,16], index: 7, kind: input, shape index: {}]
  %s8 = inlined_call_operand.vmem [shape: f32[16,8], index: 8, kind: input, shape index: {}]
  %s9 = inlined_call_operand.vmem [shape: f32[2,1,1], index: 9, kind: output, shape index: {}]
  %s10 = sld [smem:[#allocation0]]
  $region93: #{tpu_custom_call.1} parent=0
    _
  %s12 = ssub.s32 1, %s10
  %s13 = scalar_select 0, %s12, %s10
  $region1: #{tpu_custom_call.1} parent=0
    #allocation6 [shape = 'u8[4096]{0}', space=vmem, size = 0x1000, scoped, tag = 'input window, operand 1']
    #allocation7 [shape = 's32[2]{0}', space=sflag, size = 0x8, scoped, tag = 'scoped memory for tpu_custom_call.1']
    #allocation8 [shape = 'u8[16384]{0}', space=vmem, size = 0x4000, scoped, tag = 'input window, operand 3']
    #allocation9 [shape = 's32[2]{0}', space=sflag, size = 0x8, scoped, tag = 'scoped memory for tpu_custom_call.1']
    #allocation10 [shape = 'u8[16384]{0}', space=vmem, size = 0x4000, scoped, tag = 'input window, operand 4']
    #allocation11 [shape = 'u8[2048]{0}', space=vmem, size = 0x800, scoped, tag = 'input window, operand 5, single buffered']
    #allocation12 [shape = 's32[1]{0}', space=sflag, size = 0x4, scoped, tag = 'scoped memory for tpu_custom_call.1']
    %14 = vsyncpa [#allocation7], 0
    %s15 = scalar_lea.sflag [#allocation7], 1
    %16 = vsyncpa %s15, 0
    %17 = vsyncpa [#allocation9], 0
    %s18 = scalar_lea.sflag [#allocation9], 1
    %19 = vsyncpa %s18, 0
    %20 = vsyncpa [#allocation12], 0
    loop: start=0, step=1, limit=4
    $region2: #{tpu_custom_call.1} parent=1 // loop_pre_header
      _
    $region3: #{tpu_custom_call.1} parent=1 // loop_header
      %s22 = sphi 0, %s26
      %p23 = scmp.ge.s32.totalorder %s22, 4
      %s29 = sphi 0, %s41
      %s30 = sphi 0, %s37
      %s31 = sphi 0, %s29
      %s32 = sphi 0, %s30
      %s33 = sphi 0, %s31
      %s34 = sphi 0, %s32
      %s46 = sphi 0, %s48
      %s49 = sphi 0, %s46
      %s50 = sphi 0, %s49
      %s66 = sphi 0, %s50
      %s74 = sphi 0, %s76
      %s77 = sphi 0, %s74
      %s78 = sphi 0, %s77
      %s94 = sphi 0, %s78
      %s102 = sphi 0, %s104
      %s105 = sphi 0, %s102
      %s106 = sphi 0, %s105
      %s122 = sphi 0, %s106
      %s130 = sphi 0, %s132
      %s133 = sphi 0, %s130
      %s134 = sphi 0, %s133
      %s150 = sphi 0, %s134
      %s158 = sphi 0, %s160
      %s161 = sphi 0, %s158
      %s162 = sphi 0, %s161
      %s178 = sphi 0, %s162
      %s182 = sphi 0, %s182
      %s184 = sphi 0, %s182
      %s185 = sphi 0, %s184
      %s199 = sphi 0, %s185
      %s203 = sphi 0, %s203
      %s205 = sphi 0, %s203
      %s206 = sphi 0, %s205
      %s220 = sphi 0, %s206
      %s224 = sphi 0, %s224
      %s226 = sphi 0, %s224
      %s227 = sphi 0, %s226
      %s241 = sphi 0, %s227
      %s245 = sphi 0, %s245
      %s247 = sphi 0, %s245
      %s248 = sphi 0, %s247
      %s262 = sphi 0, %s248
      %s268 = sphi 0, %s270
      %s271 = sphi 0, %s268
      %s272 = sphi 0, %s271
      %s288 = sphi 0, %s272
    $region4: #{tpu_custom_call.1} parent=1 // loop_header_branch
      %25 = sbr.rel (%p23) target = $region8
    $region5: #{tpu_custom_call.1} parent=1 // loop_body
      %s27 = ssub.s32 %s22, 1
      %s28 = ssub.s32 %s22, 2
      %s35 = sadd.s32 1, %s30
      %p36 = scmp.ge.s32.totalorder %s35, 1
      %s37 = scalar_select %p36, 0, %s35
      %s38 = sadd.s32 1, %s29
      %s39 = scalar_select %p36, %s38, %s29
      %p40 = scmp.ge.s32.totalorder %s39, 2
      %s41 = scalar_select %p40, 0, %s39
      %s42 = sadd.s32 %s29, %s30
      %s43 = sadd.s32 %s41, %s37
      %s44 = ssub.s32 %s42, %s43
      %p45 = scmp.eq.s32.totalorder %s44, 0
      %s47 = sadd.s32 %s46, 1
      %s48 = scalar_select %p45, %s46, %s47
      %p51 = pneg %p45
      %p52 = scmp.eq.s32.totalorder %s22, 1
      %p53 = por %p51, %p52
      %p54 = scmp.ne.s32.totalorder %s46, %s49
      %p55 = scmp.eq.s32.totalorder %s22, 0
      %p56 = por %p54, %p55
      %p57 = scmp.ne.s32.totalorder %s46, %s49
      %p58 = scmp.eq.s32.totalorder %s27, 1
      %p59 = por %p57, %p58
      %p60 = scmp.ne.s32.totalorder %s49, %s50
      %p61 = scmp.eq.s32.totalorder %s27, 0
      %p62 = por %p60, %p61
      %p63 = scmp.ne.s32.totalorder %s49, %s50
      %p64 = scmp.eq.s32.totalorder %s28, 1
      %p65 = por %p63, %p64
      %p67 = scmp.ne.s32.totalorder %s50, %s66
      %p68 = scmp.eq.s32.totalorder %s28, 0
      %p69 = por %p67, %p68
      %s70 = sadd.s32 %s29, %s30
      %s71 = sadd.s32 %s41, %s37
      %s72 = ssub.s32 %s70, %s71
      %p73 = scmp.eq.s32.totalorder %s72, 0
      %s75 = sadd.s32 %s74, 1
      %s76 = scalar_select %p73, %s74, %s75
      %p79 = pneg %p73
      %p80 = scmp.eq.s32.totalorder %s22, 1
      %p81 = por %p79, %p80
      %p82 = scmp.ne.s32.totalorder %s74, %s77
      %p83 = scmp.eq.s32.totalorder %s22, 0
      %p84 = por %p82, %p83
      %p85 = scmp.ne.s32.totalorder %s74, %s77
      %p86 = scmp.eq.s32.totalorder %s27, 1
      %p87 = por %p85, %p86
      %p88 = scmp.ne.s32.totalorder %s77, %s78
      %p89 = scmp.eq.s32.totalorder %s27, 0
      %p90 = por %p88, %p89
      %p91 = scmp.ne.s32.totalorder %s77, %s78
      %p92 = scmp.eq.s32.totalorder %s28, 1
      %p93 = por %p91, %p92
      %p95 = scmp.ne.s32.totalorder %s78, %s94
      %p96 = scmp.eq.s32.totalorder %s28, 0
      %p97 = por %p95, %p96
      %s98 = sadd.s32 %s29, %s30
      %s99 = sadd.s32 %s41, %s37
      %s100 = ssub.s32 %s98, %s99
      %p101 = scmp.eq.s32.totalorder %s100, 0
      %s103 = sadd.s32 %s102, 1
      %s104 = scalar_select %p101, %s102, %s103
      %p107 = pneg %p101
      %p108 = scmp.eq.s32.totalorder %s22, 1
      %p109 = por %p107, %p108
      %p110 = scmp.ne.s32.totalorder %s102, %s105
      %p111 = scmp.eq.s32.totalorder %s22, 0
      %p112 = por %p110, %p111
      %p113 = scmp.ne.s32.totalorder %s102, %s105
      %p114 = scmp.eq.s32.totalorder %s27, 1
      %p115 = por %p113, %p114
      %p116 = scmp.ne.s32.totalorder %s105, %s106
      %p117 = scmp.eq.s32.totalorder %s27, 0
      %p118 = por %p116, %p117
      %p119 = scmp.ne.s32.totalorder %s105, %s106
      %p120 = scmp.eq.s32.totalorder %s28, 1
      %p121 = por %p119, %p120
      %p123 = scmp.ne.s32.totalorder %s106, %s122
      %p124 = scmp.eq.s32.totalorder %s28, 0
      %p125 = por %p123, %p124
      %s126 = sadd.s32 %s29, %s30
      %s127 = sadd.s32 %s41, %s37
      %s128 = ssub.s32 %s126, %s127
      %p129 = scmp.eq.s32.totalorder %s128, 0
      %s131 = sadd.s32 %s130, 1
      %s132 = scalar_select %p129, %s130, %s131
      %p135 = pneg %p129
      %p136 = scmp.eq.s32.totalorder %s22, 1
      %p137 = por %p135, %p136
      %p138 = scmp.ne.s32.totalorder %s130, %s133
      %p139 = scmp.eq.s32.totalorder %s22, 0
      %p140 = por %p138, %p139
      %p141 = scmp.ne.s32.totalorder %s130, %s133
      %p142 = scmp.eq.s32.totalorder %s27, 1
      %p143 = por %p141, %p142
      %p144 = scmp.ne.s32.totalorder %s133, %s134
      %p145 = scmp.eq.s32.totalorder %s27, 0
      %p146 = por %p144, %p145
      %p147 = scmp.ne.s32.totalorder %s133, %s134
      %p148 = scmp.eq.s32.totalorder %s28, 1
      %p149 = por %p147, %p148
      %p151 = scmp.ne.s32.totalorder %s134, %s150
      %p152 = scmp.eq.s32.totalorder %s28, 0
      %p153 = por %p151, %p152
      %s154 = sadd.s32 %s29, %s30
      %s155 = sadd.s32 %s41, %s37
      %s156 = ssub.s32 %s154, %s155
      %p157 = scmp.eq.s32.totalorder %s156, 0
      %s159 = sadd.s32 %s158, 1
      %s160 = scalar_select %p157, %s158, %s159
      %p163 = pneg %p157
      %p164 = scmp.eq.s32.totalorder %s22, 1
      %p165 = por %p163, %p164
      %p166 = scmp.ne.s32.totalorder %s158, %s161
      %p167 = scmp.eq.s32.totalorder %s22, 0
      %p168 = por %p166, %p167
      %p169 = scmp.ne.s32.totalorder %s158, %s161
      %p170 = scmp.eq.s32.totalorder %s27, 1
      %p171 = por %p169, %p170
      %p172 = scmp.ne.s32.totalorder %s161, %s162
      %p173 = scmp.eq.s32.totalorder %s27, 0
      %p174 = por %p172, %p173
      %p175 = scmp.ne.s32.totalorder %s161, %s162
      %p176 = scmp.eq.s32.totalorder %s28, 1
      %p177 = por %p175, %p176
      %p179 = scmp.ne.s32.totalorder %s162, %s178
      %p180 = scmp.eq.s32.totalorder %s28, 0
      %p181 = por %p179, %p180
      %s183 = sadd.s32 %s182, 1
      %p186 = scmp.eq.s32.totalorder %s22, 1
      %p187 = scmp.ne.s32.totalorder %s182, %s184
      %p188 = scmp.eq.s32.totalorder %s22, 0
      %p189 = por %p187, %p188
      %p190 = scmp.ne.s32.totalorder %s182, %s184
      %p191 = scmp.eq.s32.totalorder %s27, 1
      %p192 = por %p190, %p191
      %p193 = scmp.ne.s32.totalorder %s184, %s185
      %p194 = scmp.eq.s32.totalorder %s27, 0
      %p195 = por %p193, %p194
      %p196 = scmp.ne.s32.totalorder %s184, %s185
      %p197 = scmp.eq.s32.totalorder %s28, 1
      %p198 = por %p196, %p197
      %p200 = scmp.ne.s32.totalorder %s185, %s199
      %p201 = scmp.eq.s32.totalorder %s28, 0
      %p202 = por %p200, %p201
      %s204 = sadd.s32 %s203, 1
      %p207 = scmp.eq.s32.totalorder %s22, 1
      %p208 = scmp.ne.s32.totalorder %s203, %s205
      %p209 = scmp.eq.s32.totalorder %s22, 0
      %p210 = por %p208, %p209
      %p211 = scmp.ne.s32.totalorder %s203, %s205
      %p212 = scmp.eq.s32.totalorder %s27, 1
      %p213 = por %p211, %p212
      %p214 = scmp.ne.s32.totalorder %s205, %s206
      %p215 = scmp.eq.s32.totalorder %s27, 0
      %p216 = por %p214, %p215
      %p217 = scmp.ne.s32.totalorder %s205, %s206
      %p218 = scmp.eq.s32.totalorder %s28, 1
      %p219 = por %p217, %p218
      %p221 = scmp.ne.s32.totalorder %s206, %s220
      %p222 = scmp.eq.s32.totalorder %s28, 0
      %p223 = por %p221, %p222
      %s225 = sadd.s32 %s224, 1
      %p228 = scmp.eq.s32.totalorder %s22, 1
      %p229 = scmp.ne.s32.totalorder %s224, %s226
      %p230 = scmp.eq.s32.totalorder %s22, 0
      %p231 = por %p229, %p230
      %p232 = scmp.ne.s32.totalorder %s224, %s226
      %p233 = scmp.eq.s32.totalorder %s27, 1
      %p234 = por %p232, %p233
      %p235 = scmp.ne.s32.totalorder %s226, %s227
      %p236 = scmp.eq.s32.totalorder %s27, 0
      %p237 = por %p235, %p236
      %p238 = scmp.ne.s32.totalorder %s226, %s227
      %p239 = scmp.eq.s32.totalorder %s28, 1
      %p240 = por %p238, %p239
      %p242 = scmp.ne.s32.totalorder %s227, %s241
      %p243 = scmp.eq.s32.totalorder %s28, 0
      %p244 = por %p242, %p243
      %s246 = sadd.s32 %s245, 1
      %p249 = scmp.eq.s32.totalorder %s22, 1
      %p250 = scmp.ne.s32.totalorder %s245, %s247
      %p251 = scmp.eq.s32.totalorder %s22, 0
      %p252 = por %p250, %p251
      %p253 = scmp.ne.s32.totalorder %s245, %s247
      %p254 = scmp.eq.s32.totalorder %s27, 1
      %p255 = por %p253, %p254
      %p256 = scmp.ne.s32.totalorder %s247, %s248
      %p257 = scmp.eq.s32.totalorder %s27, 0
      %p258 = por %p256, %p257
      %p259 = scmp.ne.s32.totalorder %s247, %s248
      %p260 = scmp.eq.s32.totalorder %s28, 1
      %p261 = por %p259, %p260
      %p263 = scmp.ne.s32.totalorder %s248, %s262
      %p264 = scmp.eq.s32.totalorder %s28, 0
      %p265 = por %p263, %p264
      %s266 = ssub.s32 %s29, %s41
      %p267 = scmp.eq.s32.totalorder %s266, 0
      %s269 = sadd.s32 %s268, 1
      %s270 = scalar_select %p267, %s268, %s269
      %p273 = pneg %p267
      %p274 = scmp.eq.s32.totalorder %s22, 1
      %p275 = por %p273, %p274
      %p276 = scmp.ne.s32.totalorder %s268, %s271
      %p277 = scmp.eq.s32.totalorder %s22, 0
      %p278 = por %p276, %p277
      %p279 = scmp.ne.s32.totalorder %s268, %s271
      %p280 = scmp.eq.s32.totalorder %s27, 1
      %p281 = por %p279, %p280
      %p282 = scmp.ne.s32.totalorder %s271, %s272
      %p283 = scmp.eq.s32.totalorder %s27, 0
      %p284 = por %p282, %p283
      %p285 = scmp.ne.s32.totalorder %s271, %s272
      %p286 = scmp.eq.s32.totalorder %s28, 1
      %p287 = por %p285, %p286
      %p289 = scmp.ne.s32.totalorder %s272, %s288
      %p290 = scmp.eq.s32.totalorder %s28, 0
      %p291 = por %p289, %p290
      %p292 = scmp.le.s32.totalorder 1, %s22
      %p293 = scmp.lt.s32.totalorder %s22, 3
      %p294 = pnand %p292, %p293
      %p295 = pneg %p294
      // Predicated region
      $region9: #{tpu_custom_call.1} parent=5 // pred_check
        _
      $region10: #{tpu_custom_call.1} parent=5 // pred_check_branch
        %297 = sbr.rel (%p294) target = $region12
      $region11: #{tpu_custom_call.1} parent=5 // pred_region
        %s298 = ssub.s32 %s22, 1
        // Predicated region
        $region13: #{tpu_custom_call.1} parent=11 // pred_check
          %p299 = pneg %p195
        $region14: #{tpu_custom_call.1} parent=11 // pred_check_branch
          %301 = sbr.rel (%p299) target = $region16
        $region15: #{tpu_custom_call.1} parent=11 // pred_region
          %s303 = ssub.s32 64, 64
          %304 = vsyncadd [#allocation12], %s303
          %s306 = sshll.u32 [#allocation11], 4
          %s307 = int_to_ptr.vmem [resolvable:$true] %s306
          %309 = dma.hbm_to_vmem [thread:$0]  %s5, 64, %s307, [#allocation12]
        $region16: #{tpu_custom_call.1} parent=11 // pred_fallthru
          _
        // Predicated region
        $region17: #{tpu_custom_call.1} parent=11 // pred_check
          %p310 = pneg %p216
        $region18: #{tpu_custom_call.1} parent=11 // pred_check_branch
          %312 = sbr.rel (%p310) target = $region20
        $region19: #{tpu_custom_call.1} parent=11 // pred_region
          _
        $region20: #{tpu_custom_call.1} parent=11 // pred_fallthru
          _
        // Predicated region
        $region21: #{tpu_custom_call.1} parent=11 // pred_check
          %p313 = pneg %p237
        $region22: #{tpu_custom_call.1} parent=11 // pred_check_branch
          %315 = sbr.rel (%p313) target = $region24
        $region23: #{tpu_custom_call.1} parent=11 // pred_region
          _
        $region24: #{tpu_custom_call.1} parent=11 // pred_fallthru
          _
        // Predicated region
        $region25: #{tpu_custom_call.1} parent=11 // pred_check
          %p316 = pneg %p258
        $region26: #{tpu_custom_call.1} parent=11 // pred_check_branch
          %318 = sbr.rel (%p316) target = $region28
        $region27: #{tpu_custom_call.1} parent=11 // pred_region
          _
        $region28: #{tpu_custom_call.1} parent=11 // pred_fallthru
          _
      $region12: #{tpu_custom_call.1} parent=5 // pred_fallthru
        _
      %p319 = scmp.lt.s32.totalorder %s22, 2
      // Predicated region
      $region29: #{tpu_custom_call.1} parent=5 // pred_check
        %p320 = pneg %p319
      $region30: #{tpu_custom_call.1} parent=5 // pred_check_branch
        %322 = sbr.rel (%p320) target = $region32
      $region31: #{tpu_custom_call.1} parent=5 // pred_region
        // Predicated region
        $region33: #{tpu_custom_call.1} parent=31 // pred_check
          %p323 = pneg %p56
        $region34: #{tpu_custom_call.1} parent=31 // pred_check_branch
          %325 = sbr.rel (%p323) target = $region36
        $region35: #{tpu_custom_call.1} parent=31 // pred_region
          %s326 = sadd.s32 %s29, %s30
          %p327 = scmp.lt.s32.totalorder %s326, 1
          %s328 = scalar_select %p327, %s326, 1
          %s329 = smul.addr %s328, 2
          %s330 = smul.addr %s329, 8
          %s331 = scalar_lea.vmem %s0, %s330
          %s332 = sadd.s32 %s29, %s30
        $region36: #{tpu_custom_call.1} parent=31 // pred_fallthru
          _
        // Predicated region
        $region37: #{tpu_custom_call.1} parent=31 // pred_check
          %p333 = pneg %p84
        $region38: #{tpu_custom_call.1} parent=31 // pred_check_branch
          %335 = sbr.rel (%p333) target = $region40
        $region39: #{tpu_custom_call.1} parent=31 // pred_region
          %s336 = sand.u32 %s74, 1
          %s337 = scalar_lea.sflag [#allocation7], %s336
          %s338 = sand.u32 %s74, 1
          %s339 = smul.addr %s338, 4
          %s340 = scalar_lea.vmem [#allocation6], %s339
          %s341 = sadd.s32 %s29, %s30
          %s343 = ssub.s32 64, 64
          %344 = vsyncadd %s337, %s343
          %s345 = smul.addr %s341, 64
          %s346 = scalar_lea.hbm %s1, %s345
          %s348 = sshll.u32 %s340, 4
          %s349 = int_to_ptr.vmem [resolvable:$true] %s348
          %351 = dma.hbm_to_vmem [thread:$0]  %s346, 64, %s349, %s337
        $region40: #{tpu_custom_call.1} parent=31 // pred_fallthru
          _
        // Predicated region
        $region41: #{tpu_custom_call.1} parent=31 // pred_check
          %p352 = pneg %p112
        $region42: #{tpu_custom_call.1} parent=31 // pred_check_branch
          %354 = sbr.rel (%p352) target = $region44
        $region43: #{tpu_custom_call.1} parent=31 // pred_region
          %s355 = sadd.s32 %s29, %s30
          %p356 = scmp.lt.s32.totalorder %s355, 1
          %s357 = scalar_select %p356, %s355, 1
          %s358 = smul.addr %s357, 8
          %s359 = scalar_lea.vmem %s2, %s358
          %s360 = sadd.s32 %s29, %s30
        $region44: #{tpu_custom_call.1} parent=31 // pred_fallthru
          _
        // Predicated region
        $region45: #{tpu_custom_call.1} parent=31 // pred_check
          %p361 = pneg %p140
        $region46: #{tpu_custom_call.1} parent=31 // pred_check_branch
          %363 = sbr.rel (%p361) target = $region48
        $region47: #{tpu_custom_call.1} parent=31 // pred_region
          %s364 = sand.u32 %s22, 1
          %s365 = scalar_lea.sflag [#allocation9], %s364
          %s366 = sand.u32 %s130, 1
          %s367 = smul.addr %s366, 16
          %s368 = scalar_lea.vmem [#allocation8], %s367
          %s369 = sadd.s32 %s29, %s30
          %s371 = ssub.s32 256, 256
          %372 = vsyncadd %s365, %s371
          %s373 = smul.addr %s369, 2
          %s374 = smul.addr %s373, 128
          %s375 = scalar_lea.hbm %s3, %s374
          %s376 = sshll.u32 %s368, 4
          %s377 = int_to_ptr.vmem [resolvable:$true] %s376
          %382 = dma.hbm_to_vmem [thread:$0]  %s375, 256, %s377, %s365, 128, 128, 8
        $region48: #{tpu_custom_call.1} parent=31 // pred_fallthru
          _
        // Predicated region
        $region49: #{tpu_custom_call.1} parent=31 // pred_check
          %p383 = pneg %p168
        $region50: #{tpu_custom_call.1} parent=31 // pred_check_branch
          %385 = sbr.rel (%p383) target = $region52
        $region51: #{tpu_custom_call.1} parent=31 // pred_region
          %s386 = sand.u32 %s22, 1
          %s387 = scalar_lea.sflag [#allocation9], %s386
          %s388 = sand.u32 %s158, 1
          %s389 = smul.addr %s388, 16
          %s390 = scalar_lea.vmem [#allocation10], %s389
          %s391 = sadd.s32 %s29, %s30
          %s393 = ssub.s32 256, 256
          %394 = vsyncadd %s387, %s393
          %s395 = smul.addr %s391, 2
          %s396 = smul.addr %s395, 128
          %s397 = scalar_lea.hbm %s4, %s396
          %s398 = sshll.u32 %s390, 4
          %s399 = int_to_ptr.vmem [resolvable:$true] %s398
          %404 = dma.hbm_to_vmem [thread:$0]  %s397, 256, %s399, %s387, 128, 128, 8
        $region52: #{tpu_custom_call.1} parent=31 // pred_fallthru
          _
      $region32: #{tpu_custom_call.1} parent=5 // pred_fallthru
        _
      %p405 = scmp.le.s32.totalorder 1, %s22
      %p406 = scmp.lt.s32.totalorder %s22, 3
      %p407 = pnand %p405, %p406
      %p408 = pneg %p407
      // Predicated region
      $region53: #{tpu_custom_call.1} parent=5 // pred_check
        _
      $region54: #{tpu_custom_call.1} parent=5 // pred_check_branch
        %410 = sbr.rel (%p407) target = $region56
      $region55: #{tpu_custom_call.1} parent=5 // pred_region
        %s411 = ssub.s32 %s22, 1
        %s412 = sand.u32 %s77, 1
        %s413 = scalar_lea.sflag [#allocation7], %s412
        %s414 = sand.u32 %s77, 1
        %s415 = smul.addr %s414, 4
        %s416 = scalar_lea.vmem [#allocation6], %s415
        // Predicated region
        $region57: #{tpu_custom_call.1} parent=55 // pred_check
          %p417 = pneg %p90
        $region58: #{tpu_custom_call.1} parent=55 // pred_check_branch
          %419 = sbr.rel (%p417) target = $region60
        $region59: #{tpu_custom_call.1} parent=55 // pred_region
          %420 = dma.done %s413, 64
        $region60: #{tpu_custom_call.1} parent=55 // pred_fallthru
          _
        %s421 = sand.u32 %s27, 1
        %s422 = scalar_lea.sflag [#allocation9], %s421
        %s423 = sand.u32 %s133, 1
        %s424 = smul.addr %s423, 16
        %s425 = scalar_lea.vmem [#allocation8], %s424
        // Predicated region
        $region61: #{tpu_custom_call.1} parent=55 // pred_check
          %p426 = pneg %p146
        $region62: #{tpu_custom_call.1} parent=55 // pred_check_branch
          %428 = sbr.rel (%p426) target = $region64
        $region63: #{tpu_custom_call.1} parent=55 // pred_region
          %429 = dma.done %s422, 256
        $region64: #{tpu_custom_call.1} parent=55 // pred_fallthru
          _
        %s430 = sand.u32 %s27, 1
        %s431 = scalar_lea.sflag [#allocation9], %s430
        %s432 = sand.u32 %s161, 1
        %s433 = smul.addr %s432, 16
        %s434 = scalar_lea.vmem [#allocation10], %s433
        // Predicated region
        $region65: #{tpu_custom_call.1} parent=55 // pred_check
          %p435 = pneg %p174
        $region66: #{tpu_custom_call.1} parent=55 // pred_check_branch
          %437 = sbr.rel (%p435) target = $region68
        $region67: #{tpu_custom_call.1} parent=55 // pred_region
          %438 = dma.done %s431, 256
        $region68: #{tpu_custom_call.1} parent=55 // pred_fallthru
          _
        // Predicated region
        $region69: #{tpu_custom_call.1} parent=55 // pred_check
          %p439 = pneg %p195
        $region70: #{tpu_custom_call.1} parent=55 // pred_check_branch
          %441 = sbr.rel (%p439) target = $region72
        $region71: #{tpu_custom_call.1} parent=55 // pred_region
          %442 = dma.done [#allocation12], 64
        $region72: #{tpu_custom_call.1} parent=55 // pred_fallthru
          _
        %s443 = sadd.s32 %s31, %s32
        %p444 = scmp.lt.s32.totalorder %s443, 1
        %s445 = scalar_select %p444, %s443, 1
        %s446 = smul.addr %s445, 2
        %s447 = smul.addr %s446, 8
        %s448 = scalar_lea.vmem %s0, %s447
        %p449 = pneg %p62
        %p450 = pneg %p59
        %s451 = sand.u32 %s77, 1
        %s452 = scalar_lea.sflag [#allocation7], %s451
        %s453 = sand.u32 %s77, 1
        %s454 = smul.addr %s453, 4
        %s455 = scalar_lea.vmem [#allocation6], %s454
        %p456 = pneg %p90
        %p457 = pneg %p87
        %s458 = sadd.s32 %s31, %s32
        %p459 = scmp.lt.s32.totalorder %s458, 1
        %s460 = scalar_select %p459, %s458, 1
        %s461 = smul.addr %s460, 8
        %s462 = scalar_lea.vmem %s2, %s461
        %p463 = pneg %p118
        %p464 = pneg %p115
        %s465 = sand.u32 %s27, 1
        %s466 = scalar_lea.sflag [#allocation9], %s465
        %s467 = sand.u32 %s133, 1
        %s468 = smul.addr %s467, 16
        %s469 = scalar_lea.vmem [#allocation8], %s468
        %p470 = pneg %p146
        %p471 = pneg %p143
        %s472 = sand.u32 %s27, 1
        %s473 = scalar_lea.sflag [#allocation9], %s472
        %s474 = sand.u32 %s161, 1
        %s475 = smul.addr %s474, 16
        %s476 = scalar_lea.vmem [#allocation10], %s475
        %p477 = pneg %p174
        %p478 = pneg %p171
        %p479 = pneg %p195
        %p480 = pneg %p192
        %p481 = pneg %p216
        %p482 = pneg %p213
        %p483 = pneg %p237
        %p484 = pneg %p234
        %p485 = pneg %p258
        %p486 = pneg %p255
        %p487 = pneg %p284
        %p488 = pneg %p281
        %p489 = scmp.lt.s32.totalorder %s31, 1
        %s490 = scalar_select %p489, %s31, 1
        %s491 = scalar_lea.vmem %s9, %s490
        %s492 = sadd.s32 %s31, %s32
        %p493 = scmp.lt.s32.totalorder %s492, 1
        %s494 = scalar_select %p493, %s492, 1
        %s495 = smul.addr %s494, 2
        %s496 = smul.addr %s495, 8
        %s497 = scalar_lea.vmem %s0, %s496
        %s498 = sadd.s32 %s31, %s32
        %s499 = sadd.s32 %s31, %s32
        %s500 = sadd.s32 %s31, %s32
        %p501 = scmp.lt.s32.totalorder %s500, 1
        %s502 = scalar_select %p501, %s500, 1
        %s503 = smul.addr %s502, 8
        %s504 = scalar_lea.vmem %s2, %s503
        %s505 = sadd.s32 %s31, %s32
        %s506 = sadd.s32 %s31, %s32
        %s507 = sadd.s32 %s31, %s32
        %p508 = scmp.lt.s32.totalorder %s31, 1
        %s509 = scalar_select %p508, %s31, 1
        %s510 = scalar_lea.vmem %s9, %s509
        %p511 = scmp.eq.s32.totalorder %s32, 0
        // Predicated region
        $region73: #{tpu_custom_call.1} parent=55 // pred_check
          %p512 = pneg %p511
        $region74: #{tpu_custom_call.1} parent=55 // pred_check_branch
          %514 = sbr.rel (%p512) target = $region76
        $region75: #{tpu_custom_call.1} parent=55 // pred_region
          %vm515 = vcmask 27648
          %516 = vst.msk [vmem:[#allocation2] sm:$0xf] %vm515, 0.0
          %vm517 = vcmask 64512
          %518 = vst.msk [vmem:[#allocation3] sm:$0xff] %vm517, 0.0
          %vm519 = vcmask 130048
          %520 = vst.msk [vmem:[#allocation4] sm:$0xff] %vm519, 0.0
          %521 = vst.msk [vmem:[#allocation4 + $0x8] sm:$0xff] %vm519, 0.0
          %522 = vst.msk [vmem:[#allocation5] sm:$0xff] %vm519, 0.0
          %523 = vst.msk [vmem:[#allocation5 + $0x8] sm:$0xff] %vm519, 0.0
        $region76: #{tpu_custom_call.1} parent=55 // pred_fallthru
          _
        %v524 = vld [vmem:[%s497] sm:$0xff]
        %v525 = vld [vmem:[%s497 + $0x8] sm:$0xff]
        %v526 = vld [vmem:[%s416] sm:$0xf]
        %v527 = vld [vmem:[#allocation11] sm:$0xf]
        %v528 = vld [vmem:[%s6] sm:$0xff]
        %v529 = vld [vmem:[%s6 + $0x8] sm:$0xff]
        %vm530 = vcmask 130048
        %v532 = vsel %vm530, %v524, 0
        %v535 = vsel %vm530, %v525, 0
        %537 = vmatprep.subr.mxu0 0.0
        %538 = vmatpush1.msra.mxu0 %v528
        %539 = vmatprep.subr.mxu0 0.0
        %540 = vmatpush1.msra.mxu0 %v529
        %541 = vmatprep.subr.mxu0 0.0
        %542 = vmatpush1.msra.mxu0 0.0
        %543 = vmatprep.subr.mxu0 0.0
        %544 = vmatpush1.msra.mxu0 0.0
        %545 = vmatprep.subr.mxu0 0.0
        %546 = vmatpush1.msra.mxu0 0.0
        %547 = vmatprep.subr.mxu0 0.0
        %548 = vmatpush1.msra.mxu0 0.0
        %549 = vmatprep.subr.mxu0 0.0
        %550 = vmatpush1.msra.mxu0 0.0
        %551 = vmatprep.subr.mxu0 0.0
        %552 = vmatpush1.msra.mxu0 0.0
        %553 = vmatprep.subr.mxu0 0.0
        %554 = vmatpush1.msra.mxu0 0.0
        %555 = vmatprep.subr.mxu0 0.0
        %556 = vmatpush1.msra.mxu0 0.0
        %557 = vmatprep.subr.mxu0 0.0
        %558 = vmatpush1.msra.mxu0 0.0
        %559 = vmatprep.subr.mxu0 0.0
        %560 = vmatpush1.msra.mxu0 0.0
        %561 = vmatprep.subr.mxu0 0.0
        %562 = vmatpush1.msra.mxu0 0.0
        %563 = vmatprep.subr.mxu0 0.0
        %564 = vmatpush1.msra.mxu0 0.0
        %565 = vmatprep.subr.mxu0 0.0
        %566 = vmatpush1.msra.mxu0 0.0
        %567 = vmatprep.subr.mxu0 0.0
        %568 = vmatpush1.msra.mxu0 0.0
        %569 = vmatprep.subr.mxu0 0.0
        %570 = vmatpush1.msra.mxu0 0.0
        %571 = vmatprep.subr.mxu0 0.0
        %572 = vmatpush1.msra.mxu0 0.0
        %573 = vmatprep.subr.mxu0 0.0
        %574 = vmatpush1.msra.mxu0 0.0
        %575 = vmatprep.subr.mxu0 0.0
        %576 = vmatpush1.msra.mxu0 0.0
        %577 = vmatprep.subr.mxu0 0.0
        %578 = vmatpush1.msra.mxu0 0.0
        %579 = vmatprep.subr.mxu0 0.0
        %580 = vmatpush1.msra.mxu0 0.0
        %581 = vmatprep.subr.mxu0 0.0
        %582 = vmatpush1.msra.mxu0 0.0
        %583 = vmatprep.subr.mxu0 0.0
        %584 = vmatpush1.msra.mxu0 0.0
        %585 = vmatprep.subr.mxu0 0.0
        %586 = vmatpush1.msra.mxu0 0.0
        %587 = vmatprep.subr.mxu0 0.0
        %588 = vmatpush1.msra.mxu0 0.0
        %589 = vmatprep.subr.mxu0 0.0
        %590 = vmatpush1.msra.mxu0 0.0
        %591 = vmatprep.subr.mxu0 0.0
        %592 = vmatpush1.msra.mxu0 0.0
        %593 = vmatprep.subr.mxu0 0.0
        %594 = vmatpush1.msra.mxu0 0.0
        %595 = vmatprep.subr.mxu0 0.0
        %596 = vmatpush1.msra.mxu0 0.0
        %597 = vmatprep.subr.mxu0 0.0
        %598 = vmatpush1.msra.mxu0 0.0
        %599 = vmatprep.subr.mxu0 0.0
        %600 = vmatpush1.msra.mxu0 0.0
        %601 = vmatprep.mubr.f32.mxu0 0.0
        %602 = vmatmul.mubr.f32.gmra.mrb[0].mxu0 %v532
        %v603 = vpop.f32.mrb[0].mxu0
        %v604 = vadd.f32 0.0, %v603
        %v605 = vpop.f32.mrb[0].mxu0
        %606 = vmatprep.mubr.f32.mxu0 0.0
        %607 = vmatmul.mubr.f32.gmra.mrb[0].mxu0 %v535
        %v608 = vpop.f32.mrb[0].mxu0
        %v609 = vadd.f32 0.0, %v608
        %v610 = vpop.f32.mrb[0].mxu0
        %611 = vdwg.mxu0
        %v613 = vsel %vm530, %v527, 0
        %615 = vmatprep.subr.mxu0 0.0
        %616 = vmatpush1.msra.mxu0 %v604
        %617 = vmatprep.subr.mxu0 0.0
        %618 = vmatpush1.msra.mxu0 %v609
        %619 = vmatprep.subr.mxu0 0.0
        %620 = vmatpush1.msra.mxu0 0.0
        %621 = vmatprep.subr.mxu0 0.0
        %622 = vmatpush1.msra.mxu0 0.0
        %623 = vmatprep.subr.mxu0 0.0
        %624 = vmatpush1.msra.mxu0 0.0
        %625 = vmatprep.subr.mxu0 0.0
        %626 = vmatpush1.msra.mxu0 0.0
        %627 = vmatprep.subr.mxu0 0.0
        %628 = vmatpush1.msra.mxu0 0.0
        %629 = vmatprep.subr.mxu0 0.0
        %630 = vmatpush1.msra.mxu0 0.0
        %631 = vmatprep.subr.mxu0 0.0
        %632 = vmatpush1.msra.mxu0 0.0
        %633 = vmatprep.subr.mxu0 0.0
        %634 = vmatpush1.msra.mxu0 0.0
        %635 = vmatprep.subr.mxu0 0.0
        %636 = vmatpush1.msra.mxu0 0.0
        %637 = vmatprep.subr.mxu0 0.0
        %638 = vmatpush1.msra.mxu0 0.0
        %639 = vmatprep.subr.mxu0 0.0
        %640 = vmatpush1.msra.mxu0 0.0
        %641 = vmatprep.subr.mxu0 0.0
        %642 = vmatpush1.msra.mxu0 0.0
        %643 = vmatprep.subr.mxu0 0.0
        %644 = vmatpush1.msra.mxu0 0.0
        %645 = vmatprep.subr.mxu0 0.0
        %646 = vmatpush1.msra.mxu0 0.0
        %647 = vmatprep.subr.mxu0 0.0
        %648 = vmatpush1.msra.mxu0 0.0
        %649 = vmatprep.subr.mxu0 0.0
        %650 = vmatpush1.msra.mxu0 0.0
        %651 = vmatprep.subr.mxu0 0.0
        %652 = vmatpush1.msra.mxu0 0.0
        %653 = vmatprep.subr.mxu0 0.0
        %654 = vmatpush1.msra.mxu0 0.0
        %655 = vmatprep.subr.mxu0 0.0
        %656 = vmatpush1.msra.mxu0 0.0
        %657 = vmatprep.subr.mxu0 0.0
        %658 = vmatpush1.msra.mxu0 0.0
        %659 = vmatprep.subr.mxu0 0.0
        %660 = vmatpush1.msra.mxu0 0.0
        %661 = vmatprep.subr.mxu0 0.0
        %662 = vmatpush1.msra.mxu0 0.0
        %663 = vmatprep.subr.mxu0 0.0
        %664 = vmatpush1.msra.mxu0 0.0
        %665 = vmatprep.subr.mxu0 0.0
        %666 = vmatpush1.msra.mxu0 0.0
        %667 = vmatprep.subr.mxu0 0.0
        %668 = vmatpush1.msra.mxu0 0.0
        %669 = vmatprep.subr.mxu0 0.0
        %670 = vmatpush1.msra.mxu0 0.0
        %671 = vmatprep.subr.mxu0 0.0
        %672 = vmatpush1.msra.mxu0 0.0
        %673 = vmatprep.subr.mxu0 0.0
        %674 = vmatpush1.msra.mxu0 0.0
        %675 = vmatprep.subr.mxu0 0.0
        %676 = vmatpush1.msra.mxu0 0.0
        %677 = vmatprep.subr.mxu0 0.0
        %678 = vmatpush1.msra.mxu0 0.0
        %679 = vmatprep.mubr.f32.mxu0 0.0
        %680 = vmatmul.mubr.f32.gmra.mrb[0].mxu0 %v613
        %v681 = vpop.f32.mrb[0].mxu0
        %v682 = vadd.f32 0.0, %v681
        %v683 = vpop.f32.mrb[0].mxu0
        %684 = vdwg.mxu0
        %v685 = vmul.f32 %v682, 0.25
        %v686 = vsub.f32 %v526, %v685
        %v687 = vand.u32 2147483647, %v686
        %vm688 = vcmp.lt.f32.partialorder %v687, 1.0
        %v689 = vmul.f32 %v686, 0.5
        %v690 = vmul.f32 %v689, %v686
        %v691 = vsub.f32 %v687, 0.5
        %v692 = vsel %vm688, %v690, %v691
        %v693 = vld [vmem:[#allocation2] sm:$0xf]
        %v694 = vadd.f32 %v693, %v692
        %vm695 = vcmask 27648
        %696 = vst.msk [vmem:[#allocation2] sm:$0xf] %vm695, %v694
        %v697 = vld [vmem:[%s504] sm:$0xff]
        %v698 = vld [vmem:[%s7] sm:$0xff]
        %v699 = vld [vmem:[%s8] sm:$0xff]
        %v700 = vld [vmem:[%s8 + $0x8] sm:$0xff]
        %701 = vmatprep.subr.mxu0 0.0
        %702 = vmatpush1.msra.mxu0 %v699
        %703 = vmatprep.subr.mxu0 0.0
        %704 = vmatpush1.msra.mxu0 %v700
        %705 = vmatprep.subr.mxu0 0.0
        %706 = vmatpush1.msra.mxu0 0.0
        %707 = vmatprep.subr.mxu0 0.0
        %708 = vmatpush1.msra.mxu0 0.0
        %709 = vmatprep.subr.mxu0 0.0
        %710 = vmatpush1.msra.mxu0 0.0
        %711 = vmatprep.subr.mxu0 0.0
        %712 = vmatpush1.msra.mxu0 0.0
        %713 = vmatprep.subr.mxu0 0.0
        %714 = vmatpush1.msra.mxu0 0.0
        %715 = vmatprep.subr.mxu0 0.0
        %716 = vmatpush1.msra.mxu0 0.0
        %717 = vmatprep.subr.mxu0 0.0
        %718 = vmatpush1.msra.mxu0 0.0
        %719 = vmatprep.subr.mxu0 0.0
        %720 = vmatpush1.msra.mxu0 0.0
        %721 = vmatprep.subr.mxu0 0.0
        %722 = vmatpush1.msra.mxu0 0.0
        %723 = vmatprep.subr.mxu0 0.0
        %724 = vmatpush1.msra.mxu0 0.0
        %725 = vmatprep.subr.mxu0 0.0
        %726 = vmatpush1.msra.mxu0 0.0
        %727 = vmatprep.subr.mxu0 0.0
        %728 = vmatpush1.msra.mxu0 0.0
        %729 = vmatprep.subr.mxu0 0.0
        %730 = vmatpush1.msra.mxu0 0.0
        %731 = vmatprep.subr.mxu0 0.0
        %732 = vmatpush1.msra.mxu0 0.0
        %733 = vmatprep.subr.mxu0 0.0
        %734 = vmatpush1.msra.mxu0 0.0
        %735 = vmatprep.subr.mxu0 0.0
        %736 = vmatpush1.msra.mxu0 0.0
        %737 = vmatprep.subr.mxu0 0.0
        %738 = vmatpush1.msra.mxu0 0.0
        %739 = vmatprep.subr.mxu0 0.0
        %740 = vmatpush1.msra.mxu0 0.0
        %741 = vmatprep.subr.mxu0 0.0
        %742 = vmatpush1.msra.mxu0 0.0
        %743 = vmatprep.subr.mxu0 0.0
        %744 = vmatpush1.msra.mxu0 0.0
        %745 = vmatprep.subr.mxu0 0.0
        %746 = vmatpush1.msra.mxu0 0.0
        %747 = vmatprep.subr.mxu0 0.0
        %748 = vmatpush1.msra.mxu0 0.0
        %749 = vmatprep.subr.mxu0 0.0
        %750 = vmatpush1.msra.mxu0 0.0
        %751 = vmatprep.subr.mxu0 0.0
        %752 = vmatpush1.msra.mxu0 0.0
        %753 = vmatprep.subr.mxu0 0.0
        %754 = vmatpush1.msra.mxu0 0.0
        %755 = vmatprep.subr.mxu0 0.0
        %756 = vmatpush1.msra.mxu0 0.0
        %757 = vmatprep.subr.mxu0 0.0
        %758 = vmatpush1.msra.mxu0 0.0
        %759 = vmatprep.subr.mxu0 0.0
        %760 = vmatpush1.msra.mxu0 0.0
        %761 = vmatprep.subr.mxu0 0.0
        %762 = vmatpush1.msra.mxu0 0.0
        %763 = vmatprep.subr.mxu0 0.0
        %764 = vmatpush1.msra.mxu0 0.0
        %765 = vmatprep.mubr.f32.mxu0 0.0
        %766 = vmatmul.mubr.f32.gmra.mrb[0].mxu0 %v532
        %v767 = vpop.f32.mrb[0].mxu0
        %v768 = vadd.f32 0.0, %v767
        %v769 = vpop.f32.mrb[0].mxu0
        %770 = vmatprep.mubr.f32.mxu0 0.0
        %771 = vmatmul.mubr.f32.gmra.mrb[0].mxu0 %v535
        %v772 = vpop.f32.mrb[0].mxu0
        %v773 = vadd.f32 0.0, %v772
        %v774 = vpop.f32.mrb[0].mxu0
        %775 = vdwg.mxu0
        %v777 = vsel %vm530, %v698, 0
        %779 = vmatprep.subr.mxu0 0.0
        %780 = vmatpush1.msra.mxu0 %v768
        %781 = vmatprep.subr.mxu0 0.0
        %782 = vmatpush1.msra.mxu0 %v773
        %783 = vmatprep.subr.mxu0 0.0
        %784 = vmatpush1.msra.mxu0 0.0
        %785 = vmatprep.subr.mxu0 0.0
        %786 = vmatpush1.msra.mxu0 0.0
        %787 = vmatprep.subr.mxu0 0.0
        %788 = vmatpush1.msra.mxu0 0.0
        %789 = vmatprep.subr.mxu0 0.0
        %790 = vmatpush1.msra.mxu0 0.0
        %791 = vmatprep.subr.mxu0 0.0
        %792 = vmatpush1.msra.mxu0 0.0
        %793 = vmatprep.subr.mxu0 0.0
        %794 = vmatpush1.msra.mxu0 0.0
        %795 = vmatprep.subr.mxu0 0.0
        %796 = vmatpush1.msra.mxu0 0.0
        %797 = vmatprep.subr.mxu0 0.0
        %798 = vmatpush1.msra.mxu0 0.0
        %799 = vmatprep.subr.mxu0 0.0
        %800 = vmatpush1.msra.mxu0 0.0
        %801 = vmatprep.subr.mxu0 0.0
        %802 = vmatpush1.msra.mxu0 0.0
        %803 = vmatprep.subr.mxu0 0.0
        %804 = vmatpush1.msra.mxu0 0.0
        %805 = vmatprep.subr.mxu0 0.0
        %806 = vmatpush1.msra.mxu0 0.0
        %807 = vmatprep.subr.mxu0 0.0
        %808 = vmatpush1.msra.mxu0 0.0
        %809 = vmatprep.subr.mxu0 0.0
        %810 = vmatpush1.msra.mxu0 0.0
        %811 = vmatprep.subr.mxu0 0.0
        %812 = vmatpush1.msra.mxu0 0.0
        %813 = vmatprep.subr.mxu0 0.0
        %814 = vmatpush1.msra.mxu0 0.0
        %815 = vmatprep.subr.mxu0 0.0
        %816 = vmatpush1.msra.mxu0 0.0
        %817 = vmatprep.subr.mxu0 0.0
        %818 = vmatpush1.msra.mxu0 0.0
        %819 = vmatprep.subr.mxu0 0.0
        %820 = vmatpush1.msra.mxu0 0.0
        %821 = vmatprep.subr.mxu0 0.0
        %822 = vmatpush1.msra.mxu0 0.0
        %823 = vmatprep.subr.mxu0 0.0
        %824 = vmatpush1.msra.mxu0 0.0
        %825 = vmatprep.subr.mxu0 0.0
        %826 = vmatpush1.msra.mxu0 0.0
        %827 = vmatprep.subr.mxu0 0.0
        %828 = vmatpush1.msra.mxu0 0.0
        %829 = vmatprep.subr.mxu0 0.0
        %830 = vmatpush1.msra.mxu0 0.0
        %831 = vmatprep.subr.mxu0 0.0
        %832 = vmatpush1.msra.mxu0 0.0
        %833 = vmatprep.subr.mxu0 0.0
        %834 = vmatpush1.msra.mxu0 0.0
        %835 = vmatprep.subr.mxu0 0.0
        %836 = vmatpush1.msra.mxu0 0.0
        %837 = vmatprep.subr.mxu0 0.0
        %838 = vmatpush1.msra.mxu0 0.0
        %839 = vmatprep.subr.mxu0 0.0
        %840 = vmatpush1.msra.mxu0 0.0
        %841 = vmatprep.subr.mxu0 0.0
        %842 = vmatpush1.msra.mxu0 0.0
        %843 = vmatprep.mubr.f32.mxu0 0.0
        %844 = vmatmul.mubr.f32.gmra.mrb[0].mxu0 %v777
        %v845 = vpop.f32.mrb[0].mxu0
        %v846 = vadd.f32 0.0, %v845
        %v847 = vpop.f32.mrb[0].mxu0
        %848 = vdwg.mxu0
        %v849 = vmul.f32 %v846, 0.5
        %v850 = vsub.f32 %v697, %v849
        %v851 = vand.u32 2147483647, %v850
        %vm852 = vcmp.lt.f32.partialorder %v851, 1.0
        %v853 = vmul.f32 %v850, 0.5
        %v854 = vmul.f32 %v853, %v850
        %v855 = vsub.f32 %v851, 0.5
        %v856 = vsel %vm852, %v854, %v855
        %v857 = vld [vmem:[#allocation3] sm:$0xff]
        %v858 = vadd.f32 %v857, %v856
        %vm859 = vcmask 64512
        %860 = vst.msk [vmem:[#allocation3] sm:$0xff] %vm859, %v858
        %v861 = vld [vmem:[%s425] sm:$0xff]
        %v862 = vld [vmem:[%s425 + $0x8] sm:$0xff]
        %v863 = vsub.f32 %v861, %v524
        %v864 = vsub.f32 %v862, %v525
        %v865 = vand.u32 2147483647, %v863
        %v866 = vand.u32 2147483647, %v864
        %vm867 = vcmp.lt.f32.partialorder %v865, 1.0
        %vm868 = vcmp.lt.f32.partialorder %v866, 1.0
        %v869 = vmul.f32 %v863, 0.5
        %v870 = vmul.f32 %v864, 0.5
        %v871 = vmul.f32 %v869, %v863
        %v872 = vmul.f32 %v870, %v864
        %v873 = vsub.f32 %v865, 0.5
        %v874 = vsub.f32 %v866, 0.5
        %v875 = vsel %vm867, %v871, %v873
        %v876 = vsel %vm868, %v872, %v874
        %v877 = vld [vmem:[#allocation4] sm:$0xff]
        %v878 = vld [vmem:[#allocation4 + $0x8] sm:$0xff]
        %v879 = vadd.f32 %v877, %v875
        %v880 = vadd.f32 %v878, %v876
        %881 = vst.msk [vmem:[#allocation4] sm:$0xff] %vm530, %v879
        %882 = vst.msk [vmem:[#allocation4 + $0x8] sm:$0xff] %vm530, %v880
        %v883 = vld [vmem:[%s434] sm:$0xff]
        %v884 = vld [vmem:[%s434 + $0x8] sm:$0xff]
        %v885 = vsub.f32 %v883, %v524
        %v886 = vsub.f32 %v884, %v525
        %v887 = vand.u32 2147483647, %v885
        %v888 = vand.u32 2147483647, %v886
        %vm889 = vcmp.lt.f32.partialorder %v887, 1.0
        %vm890 = vcmp.lt.f32.partialorder %v888, 1.0
        %v891 = vmul.f32 %v885, 0.5
        %v892 = vmul.f32 %v886, 0.5
        %v893 = vmul.f32 %v891, %v885
        %v894 = vmul.f32 %v892, %v886
        %v895 = vsub.f32 %v887, 0.5
        %v896 = vsub.f32 %v888, 0.5
        %v897 = vsel %vm889, %v893, %v895
        %v898 = vsel %vm890, %v894, %v896
        %v899 = vld [vmem:[#allocation5] sm:$0xff]
        %v900 = vld [vmem:[#allocation5 + $0x8] sm:$0xff]
        %v901 = vadd.f32 %v899, %v897
        %v902 = vadd.f32 %v900, %v898
        %903 = vst.msk [vmem:[#allocation5] sm:$0xff] %vm530, %v901
        %904 = vst.msk [vmem:[#allocation5 + $0x8] sm:$0xff] %vm530, %v902
        // Predicated region
        $region77: #{tpu_custom_call.1} parent=55 // pred_check
          %p905 = pneg %p511
        $region78: #{tpu_custom_call.1} parent=55 // pred_check_branch
          %907 = sbr.rel (%p905) target = $region80
        $region79: #{tpu_custom_call.1} parent=55 // pred_region
          %v908 = vld [vmem:[#allocation2] sm:$0xf]
          %v909 = vsel %vm695, %v908, 0.0
          %910 = vadd.xlane.f32.xlu0 %v909
          %v911 = vpop.xlane.xlu0 %910
          %v912 = vrot.slane %v911, 4
          %v913 = vadd.f32 %v911, %v912
          %v914 = vrot.slane %v913, 2
          %v915 = vadd.f32 %v913, %v914
          %v916 = vrot.slane %v915, 1
          %v917 = vadd.f32 %v915, %v916
          %s918 = vtos %v917
          %s919 = smul.f32 %s918, 0.01875
          %s920 = sadd.f32 %s919, 0.0
          %v921 = vld [vmem:[#allocation3] sm:$0xff]
          %v922 = vsel %vm859, %v921, 0.0
          %923 = vadd.xlane.f32.xlu0 %v922
          %v924 = vpop.xlane.xlu0 %923
          %v925 = vrot.slane %v924, 4
          %v926 = vadd.f32 %v924, %v925
          %v927 = vrot.slane %v926, 2
          %v928 = vadd.f32 %v926, %v927
          %v929 = vrot.slane %v928, 1
          %v930 = vadd.f32 %v928, %v929
          %s931 = vtos %v930
          %s932 = smul.f32 %s931, 0.00625
          %s933 = sadd.f32 %s920, %s932
          %v934 = vld [vmem:[#allocation4] sm:$0xff]
          %v935 = vld [vmem:[#allocation4 + $0x8] sm:$0xff]
          %v936 = vsel %vm530, %v934, 0.0
          %v937 = vsel %vm530, %v935, 0.0
          %v938 = vadd.f32 %v936, %v937
          %939 = vadd.xlane.f32.xlu0 %v938
          %v940 = vpop.xlane.xlu0 %939
          %v941 = vrot.slane %v940, 4
          %v942 = vadd.f32 %v940, %v941
          %v943 = vrot.slane %v942, 2
          %v944 = vadd.f32 %v942, %v943
          %v945 = vrot.slane %v944, 1
          %v946 = vadd.f32 %v944, %v945
          %s947 = vtos %v946
          %s948 = smul.f32 %s947, 0.001953125
          %s949 = sadd.f32 %s933, %s948
          %v950 = vld [vmem:[#allocation5] sm:$0xff]
          %v951 = vld [vmem:[#allocation5 + $0x8] sm:$0xff]
          %v952 = vsel %vm530, %v950, 0.0
          %v953 = vsel %vm530, %v951, 0.0
          %v954 = vadd.f32 %v952, %v953
          %955 = vadd.xlane.f32.xlu0 %v954
          %v956 = vpop.xlane.xlu0 %955
          %v957 = vrot.slane %v956, 4
          %v958 = vadd.f32 %v956, %v957
          %v959 = vrot.slane %v958, 2
          %v960 = vadd.f32 %v958, %v959
          %v961 = vrot.slane %v960, 1
          %v962 = vadd.f32 %v960, %v961
          %s963 = vtos %v962
          %s964 = smul.f32 %s963, 0.001953125
          %s965 = sadd.f32 %s949, %s964
          %v966 = vstv %s965
          %vm967 = vcmask 0
          %968 = vst.msk [vmem:[%s510] sm:$0x1] %vm967, %v966
        $region80: #{tpu_custom_call.1} parent=55 // pred_fallthru
          _
        %p969 = scmp.lt.s32.totalorder %s31, 1
        %s970 = scalar_select %p969, %s31, 1
        %s971 = scalar_lea.vmem %s9, %s970
        // Predicated region
        $region81: #{tpu_custom_call.1} parent=55 // pred_check
          %p972 = pneg %p281
        $region82: #{tpu_custom_call.1} parent=55 // pred_check_branch
          %974 = sbr.rel (%p972) target = $region84
        $region83: #{tpu_custom_call.1} parent=55 // pred_region
          _
        $region84: #{tpu_custom_call.1} parent=55 // pred_fallthru
          _
      $region56: #{tpu_custom_call.1} parent=5 // pred_fallthru
        _
      %p975 = scmp.le.s32.totalorder 2, %s22
      // Predicated region
      $region85: #{tpu_custom_call.1} parent=5 // pred_check
        %p976 = pneg %p975
      $region86: #{tpu_custom_call.1} parent=5 // pred_check_branch
        %978 = sbr.rel (%p976) target = $region88
      $region87: #{tpu_custom_call.1} parent=5 // pred_region
        %s979 = ssub.s32 %s22, 2
        // Predicated region
        $region89: #{tpu_custom_call.1} parent=87 // pred_check
          %p980 = pneg %p287
        $region90: #{tpu_custom_call.1} parent=87 // pred_check_branch
          %982 = sbr.rel (%p980) target = $region92
        $region91: #{tpu_custom_call.1} parent=87 // pred_region
          %p983 = scmp.lt.s32.totalorder %s33, 1
          %s984 = scalar_select %p983, %s33, 1
          %s985 = scalar_lea.vmem %s9, %s984
        $region92: #{tpu_custom_call.1} parent=87 // pred_fallthru
          _
      $region88: #{tpu_custom_call.1} parent=5 // pred_fallthru
        _
    $region6: #{tpu_custom_call.1} parent=1 // loop_footer
      %s26 = sadd.s32 1, %s22
    $region7: #{tpu_custom_call.1} parent=1 // loop_footer_branch
      %21 = sbr.rel target = $region3
    $region8: #{tpu_custom_call.1} parent=1 // loop_exit
      _
    %986 = vsyncpa [#allocation7], 1
    %s987 = scalar_lea.sflag [#allocation7], 1
    %988 = vsyncpa %s987, 1
    %989 = vsyncpa [#allocation9], 1
    %s990 = scalar_lea.sflag [#allocation9], 1
    %991 = vsyncpa %s990, 1
    %992 = vsyncpa [#allocation12], 1

</llo_original>
